<compile_context>
chip_gen: v7x
topology: tpu7x:2x2x1
jax: 0.10.0
libtpu: 0.0.40
codegen_flags: <defaults>
</compile_context>

<pallas_src>
import functools

import jax
import jax.numpy as jnp
from jax import lax
from jax.experimental import pallas as pl
from jax.experimental.pallas import tpu as pltpu

GAMMA = 2.0
ALPHA = 0.5
SIZE_AVERAGE = True


def _focal_loss_kernel(logits_ref, labels_ref, out_ref, *, num_classes, gamma, alpha,
                       seq_len, seq_tile):
    """One (batch row, seq tile) per grid step -> a lane-dense [1, 128] partial focal sum."""
    x = logits_ref[0].astype(jnp.float32)                       # [C, tS] f32 (bf16 streamed)
    labels = labels_ref[0].astype(jnp.int32)                    # [1, tS]

    # log_softmax pieces over the class (sublane) axis.
    m = jnp.max(x, axis=0, keepdims=True)                       # [1, tS]
    sumexp = jnp.sum(jnp.exp(x - m), axis=0, keepdims=True)     # [1, tS]
    lse = jnp.log(sumexp) + m                                   # [1, tS]

    # sum over classes of log_p = sum_c x - C * lse
    sum_logp = jnp.sum(x, axis=0, keepdims=True) - float(num_classes) * lse

    # log_p at the label class: masked select of x at the label row, then subtract lse.
    cls_ids = lax.broadcasted_iota(jnp.int32, x.shape, 0)       # [C, tS]
    x_lbl = jnp.sum(jnp.where(cls_ids == labels, x, 0.0), axis=0, keepdims=True)
    lpl = x_lbl - lse                                           # [1, tS], <= 0

    one_minus = 1.0 - lpl                                       # >= 1
    if gamma == 2.0:
        w = one_minus * one_minus
    else:
        # non-integer gamma lowers to exp(gamma*log(.)) on the EUP; safe since base >= 1.
        w = one_minus ** gamma

    # Non-label classes contribute -alpha*log_p (covered by sum_logp); the label class
    # contributes -alpha*w*lpl instead of -alpha*lpl, i.e. a correction of lpl*(w - 1).
    per_col = (-alpha) * (sum_logp + lpl * (w - 1.0))           # [1, tS]

    # Zero out padded sequence columns (only present when S was rounded up to 128).
    if seq_len % seq_tile != 0:
        s = pl.program_id(1)
        col = s * seq_tile + lax.broadcasted_iota(jnp.int32, per_col.shape, 1)
        per_col = jnp.where(col < seq_len, per_col, 0.0)

    # Fold the [1, tS] row into one lane-dense [1, 128] slab (128-aligned lane slices + adds;
    # no cross-lane reduce, no masked stores, tiny HBM writeback).
    acc = per_col[:, 0:128]
    for k in range(1, seq_tile // 128):
        acc = acc + per_col[:, k * 128:(k + 1) * 128]
    out_ref[...] = acc.reshape(out_ref.shape)


def _pick_seq_tile(seq_pad, num_classes, in_itemsize, lab_itemsize, vmem_budget, batch,
                   max_seq_tile=None):
    """Largest tS (multiple of 128, divides seq_pad, <= cap) whose accounted VMEM working set
    (double-buffered logits/labels/output blocks + live f32 temporaries) fits the budget."""
    n_temps = 4  # f32 cast of x, exp(x - m), class iota, where-select (conservative count)

    def working_set(ts):
        return (2 * num_classes * ts * in_itemsize        # logits block, double-buffered
                + 2 * ts * lab_itemsize                   # labels block, double-buffered
                + 2 * 128 * 4                             # output slab, double-buffered
                + n_temps * num_classes * ts * 4)         # live in-kernel temporaries

    cap = min(seq_pad, 1024)
    if max_seq_tile is not None:
        cap = min(cap, max_seq_tile)
    ts = max(128, cap // 128 * 128)
    while ts > 128 and (seq_pad % ts != 0 or working_set(ts) > vmem_budget):
        ts -= 128
    # v7x megacore: with batch == 1 the sequence axis must supply >= 2 shardable grid steps.
    if batch == 1 and seq_pad // ts < 2 and ts > 128:
        ts = max(128, (ts // 2) // 128 * 128)
        while seq_pad % ts != 0:
            ts -= 128
    return ts


def multiclass_focal_loss(logits, labels, *, gamma=GAMMA, alpha=ALPHA,
                          size_average=SIZE_AVERAGE, max_seq_tile=None):
    """logits: [B, C, S] float, labels: [B, S] int -> scalar loss."""
    B, C, S = logits.shape
    assert labels.shape == (B, S)

    # Pad the sequence axis up to a lane multiple so every tile is lane-aligned; the padded
    # columns are masked out inside the kernel.
    S_pad = ((S + 127) // 128) * 128
    if S_pad != S:
        logits = jnp.pad(logits, ((0, 0), (0, 0), (0, S_pad - S)))
        labels = jnp.pad(labels, ((0, 0), (0, S_pad - S)))
    labels3 = labels.reshape(B, 1, S_pad)            # free view; dtype cast happens in-kernel

    # Generation-aware VMEM budget (v7x: 64 MiB per TC vs 128 MiB on v5e/v6e).
    try:
        vmem_cap = int(pltpu.get_tpu_info().vmem_capacity_bytes)
    except Exception:
        vmem_cap = 64 << 20
    vmem_budget = min(vmem_cap // 4, 8 << 20)

    in_itemsize = jnp.dtype(logits.dtype).itemsize
    lab_itemsize = jnp.dtype(labels.dtype).itemsize
    ts = _pick_seq_tile(S_pad, C, in_itemsize, lab_itemsize, vmem_budget, B, max_seq_tile)
    n_s = S_pad // ts

    kernel = functools.partial(_focal_loss_kernel, num_classes=C, gamma=float(gamma),
                               alpha=float(alpha), seq_len=S, seq_tile=ts)

    cost = pl.CostEstimate(
        flops=int(8 * B * C * S_pad),
        transcendentals=int(B * C * S_pad + 2 * B * S_pad),
        bytes_accessed=int(B * C * S_pad * in_itemsize
                           + B * S_pad * lab_itemsize
                           + B * n_s * 128 * 4),
    )

    partials = pl.pallas_call(
        kernel,
        out_shape=jax.ShapeDtypeStruct((B, n_s, 1, 128), jnp.float32),
        grid=(B, n_s),
        in_specs=[
            pl.BlockSpec((1, C, ts), lambda b, s: (b, 0, s)),   # logits tile
            pl.BlockSpec((1, 1, ts), lambda b, s: (b, 0, s)),   # labels tile (original dtype)
        ],
        out_specs=pl.BlockSpec((1, 1, 1, 128), lambda b, s: (b, s, 0, 0)),  # lane-dense slab
        compiler_params=pltpu.CompilerParams(
            dimension_semantics=("parallel", "parallel"),       # every grid point independent
            vmem_limit_bytes=int(min(vmem_cap // 2, 32 << 20)),
        ),
        cost_estimate=cost,
    )(logits, labels3)

    total = jnp.sum(partials)                                   # B * n_s * 128 f32 — tiny
    if size_average:
        return total / float(B * C * S)                         # mean over ORIGINAL elements
    return total


def _reference(logits, labels, gamma=GAMMA, alpha=ALPHA, size_average=SIZE_AVERAGE):
    B, C, S = logits.shape
    log_p = jax.nn.log_softmax(logits.astype(jnp.float32), axis=1)
    onehot = (labels[:, None, :] == jnp.arange(C)[None, :, None]).astype(jnp.float32)
    pt = onehot * log_p
    focal = -alpha * (1.0 - pt) ** gamma * log_p
    return focal.mean() if size_average else focal.sum()


if __name__ == "__main__":
    key = jax.random.PRNGKey(0)
    k1, k2, k3, k4 = jax.random.split(key, 4)

    # Case 1: shape consistent with the module (batch=2, labels_length=4, seq_length=16).
    # Exercises the pad-to-128 + in-kernel column-mask path.
    B, C, S = 2, 4, 16
    logits1 = jax.random.normal(k1, (B, C, S), dtype=jnp.float32)
    labels1 = jax.random.randint(k2, (B, S), 0, C, dtype=jnp.int32)
    loss1 = jax.block_until_ready(multiclass_focal_loss(logits1, labels1))
    ref1 = _reference(logits1, labels1)
    if not bool(jnp.allclose(loss1, ref1, rtol=1e-5, atol=1e-5)):
        raise AssertionError(f"mismatch (padded): pallas={loss1} ref={ref1}")

    # Case 2: lane-aligned seq length, single 384-lane tile (exercises the [1,384]->[1,128] fold).
    B2, C2, S2 = 2, 5, 384
    logits2 = jax.random.normal(k3, (B2, C2, S2), dtype=jnp.float32)
    labels2 = jax.random.randint(k4, (B2, S2), 0, C2, dtype=jnp.int32)
    loss2 = jax.block_until_ready(multiclass_focal_loss(logits2, labels2))
    ref2 = _reference(logits2, labels2)
    if not bool(jnp.allclose(loss2, ref2, rtol=1e-5, atol=1e-5)):
        raise AssertionError(f"mismatch (single-tile): pallas={loss2} ref={ref2}")

    # Case 3: force 128-lane tiles so the multi-tile (parallel, parallel) grid path runs.
    loss3 = jax.block_until_ready(multiclass_focal_loss(logits2, labels2, max_seq_tile=128))
    if not bool(jnp.allclose(loss3, ref2, rtol=1e-5, atol=1e-5)):
        raise AssertionError(f"mismatch (tiled): pallas={loss3} ref={ref2}")

    print("KERNEL_OK")
</pallas_src>

<mosaic_0001>
module attributes {stable_mosaic.version = 11 : i64} {
  func.func @_focal_loss_kernel(%arg0: i32, %arg1: i32, %arg2: memref<1x4x128xf32, #tpu.memory_space<vmem>>, %arg3: memref<1x1x128xi32, #tpu.memory_space<vmem>>, %arg4: memref<1x1x1x128xf32, #tpu.memory_space<vmem>>) attributes {dimension_semantics = [#tpu.dimension_semantics<parallel>, #tpu.dimension_semantics<parallel>], iteration_bounds = array<i64: 2, 1>, scalar_prefetch = 0 : i64, scratch_operands = 0 : i64, tpu.core_type = #tpu.core_type<tc>, window_params = [{transform_indices = @transform_0, window_bounds = array<i64: 1, 4, 128>}, {transform_indices = @transform_1, window_bounds = array<i64: 1, 1, 128>}, {transform_indices = @transform_2, window_bounds = array<i64: 1, 1, 1, 128>}]} {
    %c0 = arith.constant 0 : index
    %c0_0 = arith.constant 0 : index
    %c0_1 = arith.constant 0 : index
    %0 = vector.load %arg2[%c0, %c0_0, %c0_1] : memref<1x4x128xf32, #tpu.memory_space<vmem>>, vector<1x4x128xf32>
    %1 = vector.shape_cast %0 : vector<1x4x128xf32> to vector<4x128xf32>
    %c0_2 = arith.constant 0 : index
    %c0_3 = arith.constant 0 : index
    %c0_4 = arith.constant 0 : index
    %2 = vector.load %arg3[%c0_2, %c0_3, %c0_4] : memref<1x1x128xi32, #tpu.memory_space<vmem>>, vector<1x1x128xi32>
    %3 = vector.shape_cast %2 : vector<1x1x128xi32> to vector<1x128xi32>
    %cst = arith.constant dense<0xFF800000> : vector<128xf32>
    %4 = vector.multi_reduction <maximumf>, %1, %cst [0] : vector<4x128xf32> to vector<128xf32>
    %5 = vector.shape_cast %4 : vector<128xf32> to vector<1x128xf32>
    %6 = vector.broadcast %5 : vector<1x128xf32> to vector<4x128xf32>
    %7 = arith.subf %1, %6 : vector<4x128xf32>
    %8 = math.exp %7 : vector<4x128xf32>
    %cst_5 = arith.constant dense<0.000000e+00> : vector<128xf32>
    %9 = vector.multi_reduction <add>, %8, %cst_5 [0] : vector<4x128xf32> to vector<128xf32>
    %10 = vector.shape_cast %9 : vector<128xf32> to vector<1x128xf32>
    %11 = math.log %10 : vector<1x128xf32>
    %12 = arith.addf %11, %5 : vector<1x128xf32>
    %cst_6 = arith.constant dense<0.000000e+00> : vector<128xf32>
    %13 = vector.multi_reduction <add>, %1, %cst_6 [0] : vector<4x128xf32> to vector<128xf32>
    %14 = vector.shape_cast %13 : vector<128xf32> to vector<1x128xf32>
    %cst_7 = arith.constant 4.000000e+00 : f32
    %15 = vector.broadcast %cst_7 : f32 to vector<1x128xf32>
    %16 = arith.mulf %15, %12 : vector<1x128xf32>
    %17 = arith.subf %14, %16 : vector<1x128xf32>
    %18 = tpu.iota {dimensions = array<i32: 0>} : vector<4x128xi32>
    %19 = vector.broadcast %3 : vector<1x128xi32> to vector<4x128xi32>
    %20 = arith.cmpi eq, %18, %19 : vector<4x128xi32>
    %cst_8 = arith.constant 0.000000e+00 : f32
    %21 = vector.broadcast %cst_8 : f32 to vector<4x128xf32>
    %22 = arith.select %20, %1, %21 : vector<4x128xi1>, vector<4x128xf32>
    %cst_9 = arith.constant dense<0.000000e+00> : vector<128xf32>
    %23 = vector.multi_reduction <add>, %22, %cst_9 [0] : vector<4x128xf32> to vector<128xf32>
    %24 = vector.shape_cast %23 : vector<128xf32> to vector<1x128xf32>
    %25 = arith.subf %24, %12 : vector<1x128xf32>
    %cst_10 = arith.constant 1.000000e+00 : f32
    %26 = vector.broadcast %cst_10 : f32 to vector<1x128xf32>
    %27 = arith.subf %26, %25 : vector<1x128xf32>
    %28 = arith.mulf %27, %27 : vector<1x128xf32>
    %cst_11 = arith.constant 1.000000e+00 : f32
    %29 = vector.broadcast %cst_11 : f32 to vector<1x128xf32>
    %30 = arith.subf %28, %29 : vector<1x128xf32>
    %31 = arith.mulf %25, %30 : vector<1x128xf32>
    %32 = arith.addf %17, %31 : vector<1x128xf32>
    %cst_12 = arith.constant -5.000000e-01 : f32
    %33 = vector.broadcast %cst_12 : f32 to vector<1x128xf32>
    %34 = arith.mulf %33, %32 : vector<1x128xf32>
    %c128_i32 = arith.constant 128 : i32
    %35 = arith.muli %arg1, %c128_i32 : i32
    %36 = tpu.iota {dimensions = array<i32: 1>} : vector<1x128xi32>
    %37 = vector.broadcast %35 : i32 to vector<1x128xi32>
    %38 = arith.addi %37, %36 : vector<1x128xi32>
    %c16_i32 = arith.constant 16 : i32
    %39 = vector.broadcast %c16_i32 : i32 to vector<1x128xi32>
    %40 = arith.cmpi slt, %38, %39 : vector<1x128xi32>
    %cst_13 = arith.constant 0.000000e+00 : f32
    %41 = vector.broadcast %cst_13 : f32 to vector<1x128xf32>
    %42 = arith.select %40, %34, %41 : vector<1x128xi1>, vector<1x128xf32>
    %43 = vector.shape_cast %42 : vector<1x128xf32> to vector<1x1x1x128xf32>
    %c0_14 = arith.constant 0 : index
    %c0_15 = arith.constant 0 : index
    %c0_16 = arith.constant 0 : index
    %c0_17 = arith.constant 0 : index
    %44 = vector.load %arg4[%c0_14, %c0_15, %c0_16, %c0_17] : memref<1x1x1x128xf32, #tpu.memory_space<vmem>>, vector<1x1x1x128xf32>
    tpu.vector_store %arg4[%c0_14, %c0_15, %c0_16, %c0_17], %43 {strides = array<i32>} : memref<1x1x1x128xf32, #tpu.memory_space<vmem>>, vector<1x1x1x128xf32>,
    return
  }
  func.func @transform_0(%arg0: i32, %arg1: i32) -> (i32, i32, i32) {
    %c0_i32 = arith.constant 0 : i32
    %c0_i32_0 = arith.constant 0 : i32
    return %arg0, %c0_i32, %arg1 : i32, i32, i32
  }
  func.func @transform_1(%arg0: i32, %arg1: i32) -> (i32, i32, i32) {
    %c0_i32 = arith.constant 0 : i32
    %c0_i32_0 = arith.constant 0 : i32
    return %arg0, %c0_i32, %arg1 : i32, i32, i32
  }
  func.func @transform_2(%arg0: i32, %arg1: i32) -> (i32, i32, i32, i32) {
    %c0_i32 = arith.constant 0 : i32
    %c0_i32_0 = arith.constant 0 : i32
    %c0_i32_1 = arith.constant 0 : i32
    return %arg0, %arg1, %c0_i32, %c0_i32_0 : i32, i32, i32, i32
  }
}

</mosaic_0001>

<llo_original>
// kernel: tpu_custom_call.1
$region0: #{tpu_custom_call.1}
  #allocation0 [shape = 'u32[]', space=smem, size = 0x4, offset = 0x4, fixed_abs, tag = 'smem constant byte address 0x4 - core index']
  #allocation1 [shape = 'u32[144,128]{1,0:T(1,128)}', space=vmem, size = 0x12000, scoped, tag = 'internal scratch']
  %s0 = inlined_call_operand.hbm [shape: f32[2,4,128], index: 0, kind: input, shape index: {}]
  %s1 = inlined_call_operand.vmem [shape: s32[2,1,128], index: 1, kind: input, shape index: {}]
  %s2 = inlined_call_operand.hbm [shape: f32[2,1,1,128], index: 2, kind: output, shape index: {}]
  %s3 = sld [smem:[#allocation0]]
  $region45: #{tpu_custom_call.1} parent=0
    _
  %s5 = ssub.s32 1, %s3
  %s6 = scalar_select 0, %s5, %s3
  $region1: #{tpu_custom_call.1} parent=0
    #allocation2 [shape = 'u8[4096]{0}', space=vmem, size = 0x1000, scoped, tag = 'input window, operand 0']
    #allocation3 [shape = 's32[2]{0}', space=sflag, size = 0x8, scoped, tag = 'scoped memory for tpu_custom_call.1']
    #allocation4 [shape = 's32[2]{0}', space=sflag, size = 0x8, scoped, tag = 'scoped memory for tpu_custom_call.1']
    #allocation5 [shape = 'u8[1024]{0}', space=vmem, size = 0x400, scoped, tag = 'output window, operand 0']
    %7 = vsyncpa [#allocation3], 0
    %s8 = scalar_lea.sflag [#allocation3], 1
    %9 = vsyncpa %s8, 0
    %10 = vsyncpa [#allocation4], 0
    %s11 = scalar_lea.sflag [#allocation4], 1
    %12 = vsyncpa %s11, 0
    loop: start=0, step=1, limit=4
    $region2: #{tpu_custom_call.1} parent=1 // loop_pre_header
      _
    $region3: #{tpu_custom_call.1} parent=1 // loop_header
      %s14 = sphi 0, %s18
      %p15 = scmp.ge.s32.totalorder %s14, 4
      %s21 = sphi 0, %s33
      %s22 = sphi 0, %s29
      %s23 = sphi 0, %s21
      %s24 = sphi 0, %s22
      %s25 = sphi 0, %s23
      %s26 = sphi 0, %s24
      %s38 = sphi 0, %s40
      %s41 = sphi 0, %s38
      %s42 = sphi 0, %s41
      %s58 = sphi 0, %s42
      %s66 = sphi 0, %s68
      %s69 = sphi 0, %s66
      %s70 = sphi 0, %s69
      %s86 = sphi 0, %s70
      %s94 = sphi 0, %s96
      %s97 = sphi 0, %s94
      %s98 = sphi 0, %s97
      %s114 = sphi 0, %s98
    $region4: #{tpu_custom_call.1} parent=1 // loop_header_branch
      %17 = sbr.rel (%p15) target = $region8
    $region5: #{tpu_custom_call.1} parent=1 // loop_body
      %s19 = ssub.s32 %s14, 1
      %s20 = ssub.s32 %s14, 2
      %s27 = sadd.s32 1, %s22
      %p28 = scmp.ge.s32.totalorder %s27, 1
      %s29 = scalar_select %p28, 0, %s27
      %s30 = sadd.s32 1, %s21
      %s31 = scalar_select %p28, %s30, %s21
      %p32 = scmp.ge.s32.totalorder %s31, 2
      %s33 = scalar_select %p32, 0, %s31
      %s34 = ssub.s32 %s21, %s33
      %s35 = ssub.s32 %s22, %s29
      %s36 = sor.u32 %s34, %s35
      %p37 = scmp.eq.s32.totalorder %s36, 0
      %s39 = sadd.s32 %s38, 1
      %s40 = scalar_select %p37, %s38, %s39
      %p43 = pneg %p37
      %p44 = scmp.eq.s32.totalorder %s14, 1
      %p45 = por %p43, %p44
      %p46 = scmp.ne.s32.totalorder %s38, %s41
      %p47 = scmp.eq.s32.totalorder %s14, 0
      %p48 = por %p46, %p47
      %p49 = scmp.ne.s32.totalorder %s38, %s41
      %p50 = scmp.eq.s32.totalorder %s19, 1
      %p51 = por %p49, %p50
      %p52 = scmp.ne.s32.totalorder %s41, %s42
      %p53 = scmp.eq.s32.totalorder %s19, 0
      %p54 = por %p52, %p53
      %p55 = scmp.ne.s32.totalorder %s41, %s42
      %p56 = scmp.eq.s32.totalorder %s20, 1
      %p57 = por %p55, %p56
      %p59 = scmp.ne.s32.totalorder %s42, %s58
      %p60 = scmp.eq.s32.totalorder %s20, 0
      %p61 = por %p59, %p60
      %s62 = ssub.s32 %s21, %s33
      %s63 = ssub.s32 %s22, %s29
      %s64 = sor.u32 %s62, %s63
      %p65 = scmp.eq.s32.totalorder %s64, 0
      %s67 = sadd.s32 %s66, 1
      %s68 = scalar_select %p65, %s66, %s67
      %p71 = pneg %p65
      %p72 = scmp.eq.s32.totalorder %s14, 1
      %p73 = por %p71, %p72
      %p74 = scmp.ne.s32.totalorder %s66, %s69
      %p75 = scmp.eq.s32.totalorder %s14, 0
      %p76 = por %p74, %p75
      %p77 = scmp.ne.s32.totalorder %s66, %s69
      %p78 = scmp.eq.s32.totalorder %s19, 1
      %p79 = por %p77, %p78
      %p80 = scmp.ne.s32.totalorder %s69, %s70
      %p81 = scmp.eq.s32.totalorder %s19, 0
      %p82 = por %p80, %p81
      %p83 = scmp.ne.s32.totalorder %s69, %s70
      %p84 = scmp.eq.s32.totalorder %s20, 1
      %p85 = por %p83, %p84
      %p87 = scmp.ne.s32.totalorder %s70, %s86
      %p88 = scmp.eq.s32.totalorder %s20, 0
      %p89 = por %p87, %p88
      %s90 = ssub.s32 %s21, %s33
      %s91 = ssub.s32 %s22, %s29
      %s92 = sor.u32 %s90, %s91
      %p93 = scmp.eq.s32.totalorder %s92, 0
      %s95 = sadd.s32 %s94, 1
      %s96 = scalar_select %p93, %s94, %s95
      %p99 = pneg %p93
      %p100 = scmp.eq.s32.totalorder %s14, 1
      %p101 = por %p99, %p100
      %p102 = scmp.ne.s32.totalorder %s94, %s97
      %p103 = scmp.eq.s32.totalorder %s14, 0
      %p104 = por %p102, %p103
      %p105 = scmp.ne.s32.totalorder %s94, %s97
      %p106 = scmp.eq.s32.totalorder %s19, 1
      %p107 = por %p105, %p106
      %p108 = scmp.ne.s32.totalorder %s97, %s98
      %p109 = scmp.eq.s32.totalorder %s19, 0
      %p110 = por %p108, %p109
      %p111 = scmp.ne.s32.totalorder %s97, %s98
      %p112 = scmp.eq.s32.totalorder %s20, 1
      %p113 = por %p111, %p112
      %p115 = scmp.ne.s32.totalorder %s98, %s114
      %p116 = scmp.eq.s32.totalorder %s20, 0
      %p117 = por %p115, %p116
      %p118 = scmp.le.s32.totalorder 1, %s14
      %p119 = scmp.lt.s32.totalorder %s14, 3
      %p120 = pnand %p118, %p119
      %p121 = pneg %p120
      // Predicated region
      $region9: #{tpu_custom_call.1} parent=5 // pred_check
        _
      $region10: #{tpu_custom_call.1} parent=5 // pred_check_branch
        %123 = sbr.rel (%p120) target = $region12
      $region11: #{tpu_custom_call.1} parent=5 // pred_region
        %s124 = ssub.s32 %s14, 1
      $region12: #{tpu_custom_call.1} parent=5 // pred_fallthru
        _
      %p125 = scmp.lt.s32.totalorder %s14, 2
      // Predicated region
      $region13: #{tpu_custom_call.1} parent=5 // pred_check
        %p126 = pneg %p125
      $region14: #{tpu_custom_call.1} parent=5 // pred_check_branch
        %128 = sbr.rel (%p126) target = $region16
      $region15: #{tpu_custom_call.1} parent=5 // pred_region
        // Predicated region
        $region17: #{tpu_custom_call.1} parent=15 // pred_check
          %p129 = pneg %p48
        $region18: #{tpu_custom_call.1} parent=15 // pred_check_branch
          %131 = sbr.rel (%p129) target = $region20
        $region19: #{tpu_custom_call.1} parent=15 // pred_region
          %s132 = sand.u32 %s38, 1
          %s133 = scalar_lea.sflag [#allocation3], %s132
          %s134 = sand.u32 %s38, 1
          %s135 = smul.addr %s134, 4
          %s136 = scalar_lea.vmem [#allocation2], %s135
          %s138 = ssub.s32 64, 64
          %139 = vsyncadd %s133, %s138
          %s140 = sadd.s32 %s22, %s21
          %s141 = smul.addr %s140, 64
          %s142 = scalar_lea.hbm %s0, %s141
          %s144 = sshll.u32 %s136, 4
          %s145 = int_to_ptr.vmem [resolvable:$true] %s144
          %147 = dma.hbm_to_vmem [thread:$0]  %s142, 64, %s145, %s133
        $region20: #{tpu_custom_call.1} parent=15 // pred_fallthru
          _
        // Predicated region
        $region21: #{tpu_custom_call.1} parent=15 // pred_check
          %p148 = pneg %p76
        $region22: #{tpu_custom_call.1} parent=15 // pred_check_branch
          %150 = sbr.rel (%p148) target = $region24
        $region23: #{tpu_custom_call.1} parent=15 // pred_region
          %p151 = scmp.lt.s32.totalorder %s21, 1
          %s152 = scalar_select %p151, %s21, 1
          %p153 = scmp.lt.s32.totalorder %s22, 0
          %s154 = scalar_select %p153, %s22, 0
          %s155 = sadd.s32 %s154, %s152
          %s156 = scalar_lea.vmem %s1, %s155
        $region24: #{tpu_custom_call.1} parent=15 // pred_fallthru
          _
      $region16: #{tpu_custom_call.1} parent=5 // pred_fallthru
        _
      %p157 = scmp.le.s32.totalorder 1, %s14
      %p158 = scmp.lt.s32.totalorder %s14, 3
      %p159 = pnand %p157, %p158
      %p160 = pneg %p159
      // Predicated region
      $region25: #{tpu_custom_call.1} parent=5 // pred_check
        _
      $region26: #{tpu_custom_call.1} parent=5 // pred_check_branch
        %162 = sbr.rel (%p159) target = $region28
      $region27: #{tpu_custom_call.1} parent=5 // pred_region
        %s163 = ssub.s32 %s14, 1
        %s164 = sand.u32 %s41, 1
        %s165 = scalar_lea.sflag [#allocation3], %s164
        %s166 = sand.u32 %s41, 1
        %s167 = smul.addr %s166, 4
        %s168 = scalar_lea.vmem [#allocation2], %s167
        // Predicated region
        $region29: #{tpu_custom_call.1} parent=27 // pred_check
          %p169 = pneg %p54
        $region30: #{tpu_custom_call.1} parent=27 // pred_check_branch
          %171 = sbr.rel (%p169) target = $region32
        $region31: #{tpu_custom_call.1} parent=27 // pred_region
          %172 = dma.done %s165, 64
        $region32: #{tpu_custom_call.1} parent=27 // pred_fallthru
          _
        %s173 = sand.u32 %s41, 1
        %s174 = scalar_lea.sflag [#allocation3], %s173
        %s175 = sand.u32 %s41, 1
        %s176 = smul.addr %s175, 4
        %s177 = scalar_lea.vmem [#allocation2], %s176
        %p178 = pneg %p54
        %p179 = pneg %p51
        %p180 = scmp.lt.s32.totalorder %s23, 1
        %s181 = scalar_select %p180, %s23, 1
        %p182 = scmp.lt.s32.totalorder %s24, 0
        %s183 = scalar_select %p182, %s24, 0
        %s184 = sadd.s32 %s183, %s181
        %s185 = scalar_lea.vmem %s1, %s184
        %p186 = pneg %p82
        %p187 = pneg %p79
        %p188 = pneg %p110
        %p189 = pneg %p107
        %s190 = sand.u32 %s97, 1
        %s191 = scalar_lea.sflag [#allocation4], %s190
        %s192 = sand.u32 %s97, 1
        %s193 = scalar_lea.vmem [#allocation5], %s192
        %p194 = scmp.lt.s32.totalorder %s23, 1
        %s195 = scalar_select %p194, %s23, 1
        %p196 = scmp.lt.s32.totalorder %s24, 0
        %s197 = scalar_select %p196, %s24, 0
        %s198 = sadd.s32 %s197, %s195
        %s199 = scalar_lea.vmem %s1, %s198
        %v200 = vld [vmem:[%s168] sm:$0xf]
        %v201 = vld [vmem:[%s199] sm:$0x1]
        %vm202 = vcmask 1043456
        %v203 = vsel %vm202, %v200, -inf
        %v204 = vrot.slane %v203, 4
        %v205 = vmax.f32 %v203, %v204
        %v206 = vrot.slane %v205, 2
        %v207 = vmax.f32 %v205, %v206
        %v208 = vrot.slane %v207, 1
        %v209 = vmax.f32 %v207, %v208
        %v210 = vsub.f32 %v200, %v209
        %v211 = vmul.f32 %v210, 1.442695
        %v212 = vpow.pop %v211
        %v213 = vsel %vm202, %v212, 0.0
        %v214 = vrot.slane %v213, 4
        %v215 = vadd.f32 %v213, %v214
        %v216 = vrot.slane %v215, 2
        %v217 = vadd.f32 %v215, %v216
        %v218 = vrot.slane %v217, 1
        %v219 = vadd.f32 %v217, %v218
        %v220 = vlog2.pop %v219
        %v221 = vmul.f32 %v220, 0.6931472
        %v222 = vadd.f32 %v221, %v209
        %v223 = vsel %vm202, %v200, 0.0
        %v224 = vrot.slane %v223, 4
        %v225 = vadd.f32 %v223, %v224
        %v226 = vrot.slane %v225, 2
        %v227 = vadd.f32 %v225, %v226
        %v228 = vrot.slane %v227, 1
        %v229 = vadd.f32 %v227, %v228
        %v230 = vmul.f32 %v222, 4.0
        %v231 = vsub.f32 %v229, %v230
        %v232 = vlaneseq
        %v233 = vshrl.u32 %v232, 7
        %v234 = vlaneseq
        %v235 = vshrl.u32 %v234, 7
        %v236 = vsub.s32 0, %v235
        %v237 = vrot.slane %v201, %v236
        %vm238 = vcmp.eq.s32.totalorder %v233, %v237
        %v239 = vsel %vm238, %v200, 0.0
        %v240 = vsel %vm202, %v239, 0.0
        %v241 = vrot.slane %v240, 4
        %v242 = vadd.f32 %v240, %v241
        %v243 = vrot.slane %v242, 2
        %v244 = vadd.f32 %v242, %v243
        %v245 = vrot.slane %v244, 1
        %v246 = vadd.f32 %v244, %v245
        %v247 = vsub.f32 %v246, %v222
        %v248 = vsub.f32 1.0, %v247
        %v249 = vmul.f32 %v248, %v248
        %v250 = vsub.f32 %v249, 1.0
        %v251 = vmul.f32 %v247, %v250
        %v252 = vadd.f32 %v231, %v251
        %v253 = vmul.f32 %v252, -0.5
        %s254 = smul.u32 %s24, 128
        %v255 = vlaneseq
        %v256 = vand.u32 %v255, 127
        %v257 = vstv %s254
        %v258 = vadd.s32 %v257, %v256
        %vm259 = vcmp.lt.s32.totalorder %v258, 16
        %v260 = vsel %vm259, %v253, 0.0
        %261 = vst [vmem:[%s193] sm:$0x1] %v260
        %s262 = sand.u32 %s97, 1
        %s263 = scalar_lea.sflag [#allocation4], %s262
        %s264 = sand.u32 %s97, 1
        %s265 = scalar_lea.vmem [#allocation5], %s264
        // Predicated region
        $region33: #{tpu_custom_call.1} parent=27 // pred_check
          %p266 = pneg %p107
        $region34: #{tpu_custom_call.1} parent=27 // pred_check_branch
          %268 = sbr.rel (%p266) target = $region36
        $region35: #{tpu_custom_call.1} parent=27 // pred_region
          %s270 = ssub.s32 16, 16
          %271 = vsyncadd %s263, %s270
          %s272 = sadd.s32 %s24, %s23
          %s273 = smul.addr %s272, 16
          %s274 = scalar_lea.hbm %s2, %s273
          %s276 = sshll.u32 %s265, 4
          %s277 = int_to_ptr.vmem [resolvable:$true] %s276
          %279 = dma.vmem_to_hbm [thread:$0]  %s277, 16, %s274, %s263
        $region36: #{tpu_custom_call.1} parent=27 // pred_fallthru
          _
      $region28: #{tpu_custom_call.1} parent=5 // pred_fallthru
        _
      %p280 = scmp.le.s32.totalorder 2, %s14
      // Predicated region
      $region37: #{tpu_custom_call.1} parent=5 // pred_check
        %p281 = pneg %p280
      $region38: #{tpu_custom_call.1} parent=5 // pred_check_branch
        %283 = sbr.rel (%p281) target = $region40
      $region39: #{tpu_custom_call.1} parent=5 // pred_region
        %s284 = ssub.s32 %s14, 2
        // Predicated region
        $region41: #{tpu_custom_call.1} parent=39 // pred_check
          %p285 = pneg %p113
        $region42: #{tpu_custom_call.1} parent=39 // pred_check_branch
          %287 = sbr.rel (%p285) target = $region44
        $region43: #{tpu_custom_call.1} parent=39 // pred_region
          %s288 = sand.u32 %s98, 1
          %s289 = scalar_lea.sflag [#allocation4], %s288
          %s290 = sand.u32 %s98, 1
          %s291 = scalar_lea.vmem [#allocation5], %s290
          %292 = dma.done %s289, 16
        $region44: #{tpu_custom_call.1} parent=39 // pred_fallthru
          _
      $region40: #{tpu_custom_call.1} parent=5 // pred_fallthru
        _
    $region6: #{tpu_custom_call.1} parent=1 // loop_footer
      %s18 = sadd.s32 1, %s14
    $region7: #{tpu_custom_call.1} parent=1 // loop_footer_branch
      %13 = sbr.rel target = $region3
    $region8: #{tpu_custom_call.1} parent=1 // loop_exit
      _
    %293 = vsyncpa [#allocation3], 1
    %s294 = scalar_lea.sflag [#allocation3], 1
    %295 = vsyncpa %s294, 1
    %296 = vsyncpa [#allocation4], 1
    %s297 = scalar_lea.sflag [#allocation4], 1
    %298 = vsyncpa %s297, 1

</llo_original>
